<compile_context>
chip_gen: v5e
topology: v5e:2x2
jax: 0.10.0
libtpu: 0.0.40
codegen_flags: <defaults>
</compile_context>

<pallas_src>
import functools

import jax
import jax.numpy as jnp
from jax import lax
from jax.experimental import pallas as pl
from jax.experimental.pallas import tpu as pltpu


def _round_up(n: int, m: int) -> int:
    return ((n + m - 1) // m) * m


def _cdiv(a: int, b: int) -> int:
    return (a + b - 1) // b


def _logistic_kernel(x_ref, w_ref, b_ref, o_ref, acc_ref, *, d_total, block_k):
    """Grid = (batch_tiles, k_tiles). Computes sigmoid(x @ W^T + b) per tile.

    x_ref: (TB, TK) compute dtype     w_ref: (Cp, TK) compute dtype
    b_ref: (1, Cp)  f32               o_ref: (TB, Cp) out dtype
    acc_ref: (TB, Cp) f32 scratch (pre-activation accumulator across k)
    """
    k = pl.program_id(1)

    @pl.when(k == 0)
    def _():
        acc_ref[...] = jnp.zeros_like(acc_ref)

    x_blk = x_ref[...]
    w_blk = w_ref[...]
    if d_total % block_k != 0:
        # The last K block runs past the feature dim; out-of-bounds lanes hold
        # unspecified data, so zero them in both operands before the MXU.
        col = k * block_k + lax.broadcasted_iota(jnp.int32, (1, block_k), 1)
        valid = col < d_total
        x_blk = jnp.where(valid, x_blk, jnp.zeros((), x_blk.dtype))
        w_blk = jnp.where(valid, w_blk, jnp.zeros((), w_blk.dtype))

    # x @ W^T: contract the feature dim of both operands directly (PyTorch
    # (C, D) weight layout, no transpose materialization), f32 accumulation.
    acc_ref[...] += lax.dot_general(
        x_blk, w_blk,
        dimension_numbers=(((1,), (1,)), ((), ())),
        preferred_element_type=jnp.float32,
    )

    @pl.when(k == pl.num_programs(1) - 1)
    def _():
        z = acc_ref[...] + b_ref[...]          # (TB, Cp) + (1, Cp) broadcast
        o_ref[...] = jax.nn.sigmoid(z).astype(o_ref.dtype)


def logistic_forward(
    x,
    weight,
    bias,
    *,
    block_b: int = 512,
    block_k: int = 512,
    compute_dtype=None,
    out_dtype=None,
    max_resident_weight_bytes: int = 16 * 1024 * 1024,
):
    """sigmoid(x @ weight.T + bias).

    x: (B, D); weight: (C, D) (PyTorch nn.Linear layout); bias: (C,).
    compute_dtype: dtype of the MXU operands (jnp.bfloat16 halves streamed-x
        HBM bytes); accumulation / bias / sigmoid stay f32.
    out_dtype: output dtype (default: x.dtype).
    """
    B, D = x.shape
    C, d_w = weight.shape
    assert d_w == D and bias.shape == (C,)

    compute_dtype = jnp.dtype(compute_dtype or x.dtype)
    out_dtype = jnp.dtype(out_dtype or x.dtype)

    # ---- Tiling -------------------------------------------------------------
    # Lane-dense output: round the class dim up to a multiple of 128 so output
    # stores are full (unmasked) vst's.  Padded columns are sliced off outside.
    Cp = _round_up(C, 128)

    # Batch tile: multiple of the sublane quantum of the compute dtype, sized
    # so the batch grid has >= ~4 steps when B is large, capped at block_b.
    sublane_q = {4: 8, 2: 16, 1: 32}.get(compute_dtype.itemsize, 8)
    if B <= sublane_q:
        TB = B                                   # one block == full batch rows
    else:
        tb = min(block_b, max(sublane_q, B // 4))
        TB = min(max(sublane_q, (tb // sublane_q) * sublane_q),
                 _round_up(B, sublane_q))
    nb = _cdiv(B, TB)

    # K tiling: keep the whole (Cp, D) weight VMEM-resident when small enough;
    # otherwise stream it in 128-multiple K tiles (decisive on v7x's 64 MiB/TC).
    w_full_bytes = Cp * D * compute_dtype.itemsize
    if w_full_bytes <= max_resident_weight_bytes:
        TK = D
    else:
        TK = min(D, max(128, (block_k // 128) * 128))
    nk = _cdiv(D, TK)

    # ---- Operand prep (no batch padding: partial batch tiles are masked) ----
    # NOTE: in a real model the weight/bias padding + cast happens once at
    # parameter-init time, not per forward call.
    x_c = x if x.dtype == compute_dtype else x.astype(compute_dtype)
    if Cp == C and weight.dtype == compute_dtype:
        w_p = weight
    else:
        w_p = jnp.pad(weight, ((0, Cp - C), (0, 0))).astype(compute_dtype)
    b_p = jnp.pad(bias.astype(jnp.float32), (0, Cp - C)).reshape(1, Cp)

    # ---- VMEM budget derived from the actual block footprint ----------------
    w_bufs = 1 if nk == 1 else 2                 # grid-invariant weight -> 1 buf
    footprint = (
        2 * TB * TK * compute_dtype.itemsize         # x (double-buffered)
        + w_bufs * Cp * TK * compute_dtype.itemsize  # weight
        + 8 * Cp * 4                                 # bias (sublane-padded)
        + 2 * TB * Cp * out_dtype.itemsize           # output (double-buffered)
        + TB * Cp * 4                                # f32 accumulator scratch
    )
    try:
        phys_vmem = pltpu.get_tpu_info().vmem_capacity_bytes
    except Exception:
        phys_vmem = 64 * 1024 * 1024                 # v7x per-TC (smallest gen)
    vmem_limit = int(min(0.9 * phys_vmem,
                         max(16 * 1024 * 1024, 1.5 * footprint + (2 << 20))))

    kernel = functools.partial(_logistic_kernel, d_total=D, block_k=TK)

    def _build(use_buffer_hint: bool):
        def spec(shape, index_map, invariant):
            if use_buffer_hint and invariant:
                # Grid-invariant block: single resident buffer instead of the
                # default double buffer (halves its VMEM cost).
                return pl.BlockSpec(shape, index_map, pipeline_mode=pl.Buffered(1))
            return pl.BlockSpec(shape, index_map)

        grid_spec = pltpu.PrefetchScalarGridSpec(
            num_scalar_prefetch=0,
            grid=(nb, nk),
            in_specs=[
                spec((TB, TK), lambda i, k: (i, k), invariant=False),      # x
                spec((Cp, TK), lambda i, k: (0, k), invariant=(nk == 1)),  # W
                spec((1, Cp), lambda i, k: (0, 0), invariant=True),        # b
            ],
            out_specs=pl.BlockSpec((TB, Cp), lambda i, k: (i, 0)),
            scratch_shapes=[pltpu.VMEM((TB, Cp), jnp.float32)],
        )
        return pl.pallas_call(
            kernel,
            out_shape=jax.ShapeDtypeStruct((B, Cp), out_dtype),
            grid_spec=grid_spec,
            compiler_params=pltpu.CompilerParams(
                dimension_semantics=("parallel", "arbitrary"),
                vmem_limit_bytes=vmem_limit,
            ),
        )

    try:
        out_p = _build(True)(x_c, w_p, b_p)
    except Exception:
        # Fallback for jax versions whose auto-pipeline rejects pipeline_mode.
        out_p = _build(False)(x_c, w_p, b_p)

    return out_p[:, :C]


if __name__ == "__main__":
    key = jax.random.PRNGKey(0)

    # --- Test 1: module-scale shapes, f32 end-to-end, partial batch tile -----
    B, D, C = 12, 32, 16          # batch, input_size, num_classes
    kx, kw, kb = jax.random.split(key, 3)
    bound = 1.0 / (D ** 0.5)
    x = jax.random.normal(kx, (B, D), dtype=jnp.float32)
    weight = jax.random.uniform(kw, (C, D), minval=-bound, maxval=bound,
                                dtype=jnp.float32)
    bias = jax.random.uniform(kb, (C,), minval=-bound, maxval=bound,
                              dtype=jnp.float32)

    out = logistic_forward(x, weight, bias)
    jax.block_until_ready(out)
    ref = jax.nn.sigmoid(x @ weight.T + bias)
    assert out.shape == (B, C)
    assert out.dtype == jnp.float32
    assert jnp.allclose(out, ref, atol=1e-5, rtol=1e-5)

    # --- Test 2: bf16 operands + forced K-tiling (masked last K block) -------
    B2, D2, C2 = 20, 200, 10
    k2x, k2w, k2b = jax.random.split(jax.random.PRNGKey(0), 3)
    bound2 = 1.0 / (D2 ** 0.5)
    x2 = jax.random.normal(k2x, (B2, D2), dtype=jnp.float32)
    w2 = jax.random.uniform(k2w, (C2, D2), minval=-bound2, maxval=bound2,
                            dtype=jnp.float32)
    b2 = jax.random.uniform(k2b, (C2,), minval=-bound2, maxval=bound2,
                            dtype=jnp.float32)

    out2 = logistic_forward(
        x2, w2, b2,
        compute_dtype=jnp.bfloat16,        # halve streamed-x HBM bytes
        block_k=128,
        max_resident_weight_bytes=0,       # force the K-tiled (v7x-style) path
    )
    jax.block_until_ready(out2)
    ref2 = jax.nn.sigmoid(x2 @ w2.T + b2)
    assert out2.shape == (B2, C2)
    assert jnp.allclose(out2, ref2, atol=2e-2, rtol=2e-2)

    print("KERNEL_OK")
</pallas_src>

<mosaic_0001>
module attributes {stable_mosaic.version = 11 : i64} {
  func.func @_logistic_kernel(%arg0: i32, %arg1: i32, %arg2: memref<8x32xf32, #tpu.memory_space<vmem>>, %arg3: memref<128x32xf32, #tpu.memory_space<vmem>>, %arg4: memref<1x128xf32, #tpu.memory_space<vmem>>, %arg5: memref<8x128xf32, #tpu.memory_space<vmem>>, %arg6: memref<8x128xf32, #tpu.memory_space<vmem>>) attributes {dimension_semantics = [#tpu.dimension_semantics<parallel>, #tpu.dimension_semantics<arbitrary>], iteration_bounds = array<i64: 2, 1>, scalar_prefetch = 0 : i64, scratch_operands = 1 : i64, tpu.core_type = #tpu.core_type<tc>, window_params = [{transform_indices = @transform_0, window_bounds = array<i64: 8, 32>}, {pipeline_mode = #tpu.pipeline_mode<synchronous>, transform_indices = @transform_1, window_bounds = array<i64: 128, 32>}, {pipeline_mode = #tpu.pipeline_mode<synchronous>, transform_indices = @transform_2, window_bounds = array<i64: 1, 128>}, {transform_indices = @transform_3, window_bounds = array<i64: 8, 128>}]} {
    %c0_i32 = arith.constant 0 : i32
    %0 = arith.cmpi eq, %arg1, %c0_i32 : i32
    %1 = arith.extui %0 : i1 to i32
    %c0_i32_0 = arith.constant 0 : i32
    %2 = arith.cmpi ne, %1, %c0_i32_0 : i32
    scf.if %2 {
      %cst_10 = arith.constant 0.000000e+00 : f32
      %12 = vector.broadcast %cst_10 : f32 to vector<8x128xf32>
      %c0_11 = arith.constant 0 : index
      %c0_12 = arith.constant 0 : index
      %13 = vector.load %arg6[%c0_11, %c0_12] : memref<8x128xf32, #tpu.memory_space<vmem>>, vector<8x128xf32>
      tpu.vector_store %arg6[%c0_11, %c0_12], %12 {strides = array<i32>} : memref<8x128xf32, #tpu.memory_space<vmem>>, vector<8x128xf32>,
    } else {
    }
    %c0 = arith.constant 0 : index
    %c0_1 = arith.constant 0 : index
    %3 = vector.load %arg2[%c0, %c0_1] : memref<8x32xf32, #tpu.memory_space<vmem>>, vector<8x32xf32>
    %c0_2 = arith.constant 0 : index
    %c0_3 = arith.constant 0 : index
    %4 = vector.load %arg3[%c0_2, %c0_3] : memref<128x32xf32, #tpu.memory_space<vmem>>, vector<128x32xf32>
    %c0_4 = arith.constant 0 : index
    %c0_5 = arith.constant 0 : index
    %5 = vector.load %arg6[%c0_4, %c0_5] : memref<8x128xf32, #tpu.memory_space<vmem>>, vector<8x128xf32>
    %cst = arith.constant dense<0.000000e+00> : vector<8x128xf32>
    %6 = tpu.matmul %3, %4, %cst {dimension_numbers = #tpu.dot_dimension_numbers<[1], [1], [0], [0], [0, 0, 1, 0], [], []>} : vector<8x32xf32>, vector<128x32xf32>, vector<8x128xf32> -> vector<8x128xf32>
    %7 = arith.addf %5, %6 : vector<8x128xf32>
    %c0_6 = arith.constant 0 : index
    %c0_7 = arith.constant 0 : index
    %8 = vector.load %arg6[%c0_6, %c0_7] : memref<8x128xf32, #tpu.memory_space<vmem>>, vector<8x128xf32>
    tpu.vector_store %arg6[%c0_6, %c0_7], %7 {strides = array<i32>} : memref<8x128xf32, #tpu.memory_space<vmem>>, vector<8x128xf32>,
    %c0_i32_8 = arith.constant 0 : i32
    %9 = arith.cmpi eq, %arg1, %c0_i32_8 : i32
    %10 = arith.extui %9 : i1 to i32
    %c0_i32_9 = arith.constant 0 : i32
    %11 = arith.cmpi ne, %10, %c0_i32_9 : i32
    scf.if %11 {
      %c0_10 = arith.constant 0 : index
      %c0_11 = arith.constant 0 : index
      %12 = vector.load %arg6[%c0_10, %c0_11] : memref<8x128xf32, #tpu.memory_space<vmem>>, vector<8x128xf32>
      %c0_12 = arith.constant 0 : index
      %c0_13 = arith.constant 0 : index
      %13 = vector.load %arg4[%c0_12, %c0_13] : memref<1x128xf32, #tpu.memory_space<vmem>>, vector<1x128xf32>
      %14 = vector.broadcast %13 : vector<1x128xf32> to vector<8x128xf32>
      %15 = arith.addf %12, %14 : vector<8x128xf32>
      %16 = arith.negf %15 : vector<8x128xf32>
      %17 = math.exp %16 : vector<8x128xf32>
      %cst_14 = arith.constant 1.000000e+00 : f32
      %18 = vector.broadcast %cst_14 : f32 to vector<8x128xf32>
      %19 = arith.addf %18, %17 : vector<8x128xf32>
      %20 = arith.divf %18, %19 : vector<8x128xf32>
      %c0_15 = arith.constant 0 : index
      %c0_16 = arith.constant 0 : index
      %21 = vector.load %arg5[%c0_15, %c0_16] : memref<8x128xf32, #tpu.memory_space<vmem>>, vector<8x128xf32>
      tpu.vector_store %arg5[%c0_15, %c0_16], %20 {strides = array<i32>} : memref<8x128xf32, #tpu.memory_space<vmem>>, vector<8x128xf32>,
    } else {
    }
    return
  }
  func.func @transform_0(%arg0: i32, %arg1: i32) -> (i32, i32) {
    %c0_i32 = arith.constant 0 : i32
    return %arg0, %arg1 : i32, i32
  }
  func.func @transform_1(%arg0: i32, %arg1: i32) -> (i32, i32) {
    %c0_i32 = arith.constant 0 : i32
    %c0_i32_0 = arith.constant 0 : i32
    return %c0_i32, %arg1 : i32, i32
  }
  func.func @transform_2(%arg0: i32, %arg1: i32) -> (i32, i32) {
    %c0_i32 = arith.constant 0 : i32
    %c0_i32_0 = arith.constant 0 : i32
    %c0_i32_1 = arith.constant 0 : i32
    return %c0_i32, %c0_i32_0 : i32, i32
  }
  func.func @transform_3(%arg0: i32, %arg1: i32) -> (i32, i32) {
    %c0_i32 = arith.constant 0 : i32
    %c0_i32_0 = arith.constant 0 : i32
    return %arg0, %c0_i32 : i32, i32
  }
}

module attributes {stable_mosaic.version = 11 : i64} {
  func.func @_logistic_kernel(%arg0: i32, %arg1: i32, %arg2: memref<8x32xf32, #tpu.memory_space<vmem>>, %arg3: memref<128x32xf32, #tpu.memory_space<vmem>>, %arg4: memref<1x128xf32, #tpu.memory_space<vmem>>, %arg5: memref<8x128xf32, #tpu.memory_space<vmem>>, %arg6: memref<8x128xf32, #tpu.memory_space<vmem>>) attributes {dimension_semantics = [#tpu.dimension_semantics<parallel>, #tpu.dimension_semantics<arbitrary>], iteration_bounds = array<i64: 2, 1>, scalar_prefetch = 0 : i64, scratch_operands = 1 : i64, tpu.core_type = #tpu.core_type<tc>, window_params = [{transform_indices = @transform_0, window_bounds = array<i64: 8, 32>}, {transform_indices = @transform_1, window_bounds = array<i64: 128, 32>}, {pipeline_mode = #tpu.pipeline_mode<synchronous>, transform_indices = @transform_2, window_bounds = array<i64: 1, 128>}, {transform_indices = @transform_3, window_bounds = array<i64: 8, 128>}]} {
    %c0_i32 = arith.constant 0 : i32
    %0 = arith.cmpi eq, %arg1, %c0_i32 : i32
    %1 = arith.extui %0 : i1 to i32
    %c0_i32_0 = arith.constant 0 : i32
    %2 = arith.cmpi ne, %1, %c0_i32_0 : i32
    scf.if %2 {
      %cst_10 = arith.constant 0.000000e+00 : f32
      %12 = vector.broadcast %cst_10 : f32 to vector<8x128xf32>
      %c0_11 = arith.constant 0 : index
      %c0_12 = arith.constant 0 : index
      %13 = vector.load %arg6[%c0_11, %c0_12] : memref<8x128xf32, #tpu.memory_space<vmem>>, vector<8x128xf32>
      tpu.vector_store %arg6[%c0_11, %c0_12], %12 {strides = array<i32>} : memref<8x128xf32, #tpu.memory_space<vmem>>, vector<8x128xf32>,
    } else {
    }
    %c0 = arith.constant 0 : index
    %c0_1 = arith.constant 0 : index
    %3 = vector.load %arg2[%c0, %c0_1] : memref<8x32xf32, #tpu.memory_space<vmem>>, vector<8x32xf32>
    %c0_2 = arith.constant 0 : index
    %c0_3 = arith.constant 0 : index
    %4 = vector.load %arg3[%c0_2, %c0_3] : memref<128x32xf32, #tpu.memory_space<vmem>>, vector<128x32xf32>
    %c0_4 = arith.constant 0 : index
    %c0_5 = arith.constant 0 : index
    %5 = vector.load %arg6[%c0_4, %c0_5] : memref<8x128xf32, #tpu.memory_space<vmem>>, vector<8x128xf32>
    %cst = arith.constant dense<0.000000e+00> : vector<8x128xf32>
    %6 = tpu.matmul %3, %4, %cst {dimension_numbers = #tpu.dot_dimension_numbers<[1], [1], [0], [0], [0, 0, 1, 0], [], []>} : vector<8x32xf32>, vector<128x32xf32>, vector<8x128xf32> -> vector<8x128xf32>
    %7 = arith.addf %5, %6 : vector<8x128xf32>
    %c0_6 = arith.constant 0 : index
    %c0_7 = arith.constant 0 : index
    %8 = vector.load %arg6[%c0_6, %c0_7] : memref<8x128xf32, #tpu.memory_space<vmem>>, vector<8x128xf32>
    tpu.vector_store %arg6[%c0_6, %c0_7], %7 {strides = array<i32>} : memref<8x128xf32, #tpu.memory_space<vmem>>, vector<8x128xf32>,
    %c0_i32_8 = arith.constant 0 : i32
    %9 = arith.cmpi eq, %arg1, %c0_i32_8 : i32
    %10 = arith.extui %9 : i1 to i32
    %c0_i32_9 = arith.constant 0 : i32
    %11 = arith.cmpi ne, %10, %c0_i32_9 : i32
    scf.if %11 {
      %c0_10 = arith.constant 0 : index
      %c0_11 = arith.constant 0 : index
      %12 = vector.load %arg6[%c0_10, %c0_11] : memref<8x128xf32, #tpu.memory_space<vmem>>, vector<8x128xf32>
      %c0_12 = arith.constant 0 : index
      %c0_13 = arith.constant 0 : index
      %13 = vector.load %arg4[%c0_12, %c0_13] : memref<1x128xf32, #tpu.memory_space<vmem>>, vector<1x128xf32>
      %14 = vector.broadcast %13 : vector<1x128xf32> to vector<8x128xf32>
      %15 = arith.addf %12, %14 : vector<8x128xf32>
      %16 = arith.negf %15 : vector<8x128xf32>
      %17 = math.exp %16 : vector<8x128xf32>
      %cst_14 = arith.constant 1.000000e+00 : f32
      %18 = vector.broadcast %cst_14 : f32 to vector<8x128xf32>
      %19 = arith.addf %18, %17 : vector<8x128xf32>
      %20 = arith.divf %18, %19 : vector<8x128xf32>
      %c0_15 = arith.constant 0 : index
      %c0_16 = arith.constant 0 : index
      %21 = vector.load %arg5[%c0_15, %c0_16] : memref<8x128xf32, #tpu.memory_space<vmem>>, vector<8x128xf32>
      tpu.vector_store %arg5[%c0_15, %c0_16], %20 {strides = array<i32>} : memref<8x128xf32, #tpu.memory_space<vmem>>, vector<8x128xf32>,
    } else {
    }
    return
  }
  func.func @transform_0(%arg0: i32, %arg1: i32) -> (i32, i32) {
    %c0_i32 = arith.constant 0 : i32
    return %arg0, %arg1 : i32, i32
  }
  func.func @transform_1(%arg0: i32, %arg1: i32) -> (i32, i32) {
    %c0_i32 = arith.constant 0 : i32
    %c0_i32_0 = arith.constant 0 : i32
    return %c0_i32, %arg1 : i32, i32
  }
  func.func @transform_2(%arg0: i32, %arg1: i32) -> (i32, i32) {
    %c0_i32 = arith.constant 0 : i32
    %c0_i32_0 = arith.constant 0 : i32
    %c0_i32_1 = arith.constant 0 : i32
    return %c0_i32, %c0_i32_0 : i32, i32
  }
  func.func @transform_3(%arg0: i32, %arg1: i32) -> (i32, i32) {
    %c0_i32 = arith.constant 0 : i32
    %c0_i32_0 = arith.constant 0 : i32
    return %arg0, %c0_i32 : i32, i32
  }
}

</mosaic_0001>

<llo_original>
// kernel: tpu_custom_call.1
$region0: #{tpu_custom_call.1}
  #allocation0 [shape = 'u32[]', space=smem, size = 0x4, offset = 0x4, fixed_abs, tag = 'smem constant byte address 0x4 - core index']
  #allocation1 [shape = 'u32[72,128]{1,0:T(1,128)}', space=vmem, size = 0x9000, scoped, tag = 'internal scratch']
  #allocation2 [shape = 'f32[8,128]{1,0:T(8,128)}', space=vmem, size = 0x1000, scoped, tag = 'scratch operand']
  %s0 = inlined_call_operand.vmem [shape: f32[12,32], index: 0, kind: input, shape index: {}]
  %s1 = inlined_call_operand.vmem [shape: f32[128,32], index: 1, kind: input, shape index: {}]
  %s2 = inlined_call_operand.vmem [shape: f32[1,128], index: 2, kind: input, shape index: {}]
  %s3 = inlined_call_operand.hbm [shape: f32[12,128], index: 3, kind: output, shape index: {}]
  %s4 = sld [smem:[#allocation0]]
  $region53: #{tpu_custom_call.1} parent=0
    _
  %s6 = ssub.s32 1, %s4
  %s7 = scalar_select 0, %s6, %s4
  $region1: #{tpu_custom_call.1} parent=0
    #allocation3 [shape = 'u8[8192]{0}', space=vmem, size = 0x2000, scoped, tag = 'output window, operand 0']
    #allocation4 [shape = 's32[2]{0}', space=sflag, size = 0x8, scoped, tag = 'scoped memory for tpu_custom_call.1']
    %8 = vsyncpa [#allocation4], 0
    %s9 = scalar_lea.sflag [#allocation4], 1
    %10 = vsyncpa %s9, 0
    loop: start=0, step=1, limit=4
    $region2: #{tpu_custom_call.1} parent=1 // loop_pre_header
      _
    $region3: #{tpu_custom_call.1} parent=1 // loop_header
      %s12 = sphi 0, %s16
      %p13 = scmp.ge.s32.totalorder %s12, 4
      %s19 = sphi 0, %s31
      %s20 = sphi 0, %s27
      %s21 = sphi 0, %s19
      %s22 = sphi 0, %s20
      %s23 = sphi 0, %s21
      %s24 = sphi 0, %s22
      %s36 = sphi 0, %s38
      %s39 = sphi 0, %s36
      %s40 = sphi 0, %s39
      %s56 = sphi 0, %s40
      %s62 = sphi 0, %s64
      %s65 = sphi 0, %s62
      %s66 = sphi 0, %s65
      %s82 = sphi 0, %s66
      %s86 = sphi 0, %s86
      %s88 = sphi 0, %s86
      %s89 = sphi 0, %s88
      %s103 = sphi 0, %s89
      %s109 = sphi 0, %s111
      %s112 = sphi 0, %s109
      %s113 = sphi 0, %s112
      %s129 = sphi 0, %s113
    $region4: #{tpu_custom_call.1} parent=1 // loop_header_branch
      %15 = sbr.rel (%p13) target = $region8
    $region5: #{tpu_custom_call.1} parent=1 // loop_body
      %s17 = ssub.s32 %s12, 1
      %s18 = ssub.s32 %s12, 2
      %s25 = sadd.s32 1, %s20
      %p26 = scmp.ge.s32.totalorder %s25, 1
      %s27 = scalar_select %p26, 0, %s25
      %s28 = sadd.s32 1, %s19
      %s29 = scalar_select %p26, %s28, %s19
      %p30 = scmp.ge.s32.totalorder %s29, 2
      %s31 = scalar_select %p30, 0, %s29
      %s32 = ssub.s32 %s19, %s31
      %s33 = ssub.s32 %s20, %s27
      %s34 = sor.u32 %s32, %s33
      %p35 = scmp.eq.s32.totalorder %s34, 0
      %s37 = sadd.s32 %s36, 1
      %s38 = scalar_select %p35, %s36, %s37
      %p41 = pneg %p35
      %p42 = scmp.eq.s32.totalorder %s12, 1
      %p43 = por %p41, %p42
      %p44 = scmp.ne.s32.totalorder %s36, %s39
      %p45 = scmp.eq.s32.totalorder %s12, 0
      %p46 = por %p44, %p45
      %p47 = scmp.ne.s32.totalorder %s36, %s39
      %p48 = scmp.eq.s32.totalorder %s17, 1
      %p49 = por %p47, %p48
      %p50 = scmp.ne.s32.totalorder %s39, %s40
      %p51 = scmp.eq.s32.totalorder %s17, 0
      %p52 = por %p50, %p51
      %p53 = scmp.ne.s32.totalorder %s39, %s40
      %p54 = scmp.eq.s32.totalorder %s18, 1
      %p55 = por %p53, %p54
      %p57 = scmp.ne.s32.totalorder %s40, %s56
      %p58 = scmp.eq.s32.totalorder %s18, 0
      %p59 = por %p57, %p58
      %s60 = ssub.s32 %s20, %s27
      %p61 = scmp.eq.s32.totalorder %s60, 0
      %s63 = sadd.s32 %s62, 1
      %s64 = scalar_select %p61, %s62, %s63
      %p67 = pneg %p61
      %p68 = scmp.eq.s32.totalorder %s12, 1
      %p69 = por %p67, %p68
      %p70 = scmp.ne.s32.totalorder %s62, %s65
      %p71 = scmp.eq.s32.totalorder %s12, 0
      %p72 = por %p70, %p71
      %p73 = scmp.ne.s32.totalorder %s62, %s65
      %p74 = scmp.eq.s32.totalorder %s17, 1
      %p75 = por %p73, %p74
      %p76 = scmp.ne.s32.totalorder %s65, %s66
      %p77 = scmp.eq.s32.totalorder %s17, 0
      %p78 = por %p76, %p77
      %p79 = scmp.ne.s32.totalorder %s65, %s66
      %p80 = scmp.eq.s32.totalorder %s18, 1
      %p81 = por %p79, %p80
      %p83 = scmp.ne.s32.totalorder %s66, %s82
      %p84 = scmp.eq.s32.totalorder %s18, 0
      %p85 = por %p83, %p84
      %s87 = sadd.s32 %s86, 1
      %p90 = scmp.eq.s32.totalorder %s12, 1
      %p91 = scmp.ne.s32.totalorder %s86, %s88
      %p92 = scmp.eq.s32.totalorder %s12, 0
      %p93 = por %p91, %p92
      %p94 = scmp.ne.s32.totalorder %s86, %s88
      %p95 = scmp.eq.s32.totalorder %s17, 1
      %p96 = por %p94, %p95
      %p97 = scmp.ne.s32.totalorder %s88, %s89
      %p98 = scmp.eq.s32.totalorder %s17, 0
      %p99 = por %p97, %p98
      %p100 = scmp.ne.s32.totalorder %s88, %s89
      %p101 = scmp.eq.s32.totalorder %s18, 1
      %p102 = por %p100, %p101
      %p104 = scmp.ne.s32.totalorder %s89, %s103
      %p105 = scmp.eq.s32.totalorder %s18, 0
      %p106 = por %p104, %p105
      %s107 = ssub.s32 %s19, %s31
      %p108 = scmp.eq.s32.totalorder %s107, 0
      %s110 = sadd.s32 %s109, 1
      %s111 = scalar_select %p108, %s109, %s110
      %p114 = pneg %p108
      %p115 = scmp.eq.s32.totalorder %s12, 1
      %p116 = por %p114, %p115
      %p117 = scmp.ne.s32.totalorder %s109, %s112
      %p118 = scmp.eq.s32.totalorder %s12, 0
      %p119 = por %p117, %p118
      %p120 = scmp.ne.s32.totalorder %s109, %s112
      %p121 = scmp.eq.s32.totalorder %s17, 1
      %p122 = por %p120, %p121
      %p123 = scmp.ne.s32.totalorder %s112, %s113
      %p124 = scmp.eq.s32.totalorder %s17, 0
      %p125 = por %p123, %p124
      %p126 = scmp.ne.s32.totalorder %s112, %s113
      %p127 = scmp.eq.s32.totalorder %s18, 1
      %p128 = por %p126, %p127
      %p130 = scmp.ne.s32.totalorder %s113, %s129
      %p131 = scmp.eq.s32.totalorder %s18, 0
      %p132 = por %p130, %p131
      %p133 = scmp.le.s32.totalorder 1, %s12
      %p134 = scmp.lt.s32.totalorder %s12, 3
      %p135 = pnand %p133, %p134
      %p136 = pneg %p135
      // Predicated region
      $region9: #{tpu_custom_call.1} parent=5 // pred_check
        _
      $region10: #{tpu_custom_call.1} parent=5 // pred_check_branch
        %138 = sbr.rel (%p135) target = $region12
      $region11: #{tpu_custom_call.1} parent=5 // pred_region
        %s139 = ssub.s32 %s12, 1
        // Predicated region
        $region13: #{tpu_custom_call.1} parent=11 // pred_check
          %p140 = pneg %p78
        $region14: #{tpu_custom_call.1} parent=11 // pred_check_branch
          %142 = sbr.rel (%p140) target = $region16
        $region15: #{tpu_custom_call.1} parent=11 // pred_region
          %p143 = scmp.lt.s32.totalorder %s22, 0
          %s144 = scalar_select %p143, %s22, 0
          %s145 = smul.addr %s144, 8
          %s146 = scalar_lea.vmem %s1, %s145
        $region16: #{tpu_custom_call.1} parent=11 // pred_fallthru
          _
        // Predicated region
        $region17: #{tpu_custom_call.1} parent=11 // pred_check
          %p147 = pneg %p99
        $region18: #{tpu_custom_call.1} parent=11 // pred_check_branch
          %149 = sbr.rel (%p147) target = $region20
        $region19: #{tpu_custom_call.1} parent=11 // pred_region
          _
        $region20: #{tpu_custom_call.1} parent=11 // pred_fallthru
          _
      $region12: #{tpu_custom_call.1} parent=5 // pred_fallthru
        _
      %p150 = scmp.lt.s32.totalorder %s12, 2
      // Predicated region
      $region21: #{tpu_custom_call.1} parent=5 // pred_check
        %p151 = pneg %p150
      $region22: #{tpu_custom_call.1} parent=5 // pred_check_branch
        %153 = sbr.rel (%p151) target = $region24
      $region23: #{tpu_custom_call.1} parent=5 // pred_region
        // Predicated region
        $region25: #{tpu_custom_call.1} parent=23 // pred_check
          %p154 = pneg %p46
        $region26: #{tpu_custom_call.1} parent=23 // pred_check_branch
          %156 = sbr.rel (%p154) target = $region28
        $region27: #{tpu_custom_call.1} parent=23 // pred_region
          %p157 = scmp.lt.s32.totalorder %s19, 1
          %s158 = scalar_select %p157, %s19, 1
          %p159 = scmp.lt.s32.totalorder %s20, 0
          %s160 = scalar_select %p159, %s20, 0
          %s161 = sadd.s32 %s160, %s158
          %s162 = smul.addr %s161, 8
          %s163 = scalar_lea.vmem %s0, %s162
        $region28: #{tpu_custom_call.1} parent=23 // pred_fallthru
          _
      $region24: #{tpu_custom_call.1} parent=5 // pred_fallthru
        _
      %p164 = scmp.le.s32.totalorder 1, %s12
      %p165 = scmp.lt.s32.totalorder %s12, 3
      %p166 = pnand %p164, %p165
      %p167 = pneg %p166
      // Predicated region
      $region29: #{tpu_custom_call.1} parent=5 // pred_check
        _
      $region30: #{tpu_custom_call.1} parent=5 // pred_check_branch
        %169 = sbr.rel (%p166) target = $region32
      $region31: #{tpu_custom_call.1} parent=5 // pred_region
        %s170 = ssub.s32 %s12, 1
        %p171 = scmp.lt.s32.totalorder %s21, 1
        %s172 = scalar_select %p171, %s21, 1
        %p173 = scmp.lt.s32.totalorder %s22, 0
        %s174 = scalar_select %p173, %s22, 0
        %s175 = sadd.s32 %s174, %s172
        %s176 = smul.addr %s175, 8
        %s177 = scalar_lea.vmem %s0, %s176
        %p178 = pneg %p52
        %p179 = pneg %p49
        %p180 = scmp.lt.s32.totalorder %s22, 0
        %s181 = scalar_select %p180, %s22, 0
        %s182 = smul.addr %s181, 8
        %s183 = scalar_lea.vmem %s1, %s182
        %p184 = pneg %p78
        %p185 = pneg %p75
        %p186 = pneg %p99
        %p187 = pneg %p96
        %p188 = pneg %p125
        %p189 = pneg %p122
        %s190 = sand.u32 %s112, 1
        %s191 = scalar_lea.sflag [#allocation4], %s190
        %s192 = sand.u32 %s112, 1
        %s193 = smul.addr %s192, 8
        %s194 = scalar_lea.vmem [#allocation3], %s193
        %p195 = scmp.lt.s32.totalorder %s21, 1
        %s196 = scalar_select %p195, %s21, 1
        %p197 = scmp.lt.s32.totalorder %s22, 0
        %s198 = scalar_select %p197, %s22, 0
        %s199 = sadd.s32 %s198, %s196
        %s200 = smul.addr %s199, 8
        %s201 = scalar_lea.vmem %s0, %s200
        %p202 = scmp.lt.s32.totalorder %s22, 0
        %s203 = scalar_select %p202, %s22, 0
        %s204 = smul.addr %s203, 8
        %s205 = scalar_lea.vmem %s1, %s204
        %p206 = scmp.eq.s32.totalorder %s22, 0
        // Predicated region
        $region33: #{tpu_custom_call.1} parent=31 // pred_check
          %p207 = pneg %p206
        $region34: #{tpu_custom_call.1} parent=31 // pred_check_branch
          %209 = sbr.rel (%p207) target = $region36
        $region35: #{tpu_custom_call.1} parent=31 // pred_region
          %210 = vst [vmem:[#allocation2] sm:$0xff] 0.0
        $region36: #{tpu_custom_call.1} parent=31 // pred_fallthru
          _
        %v211 = vld [vmem:[%s201] sm:$0xff]
        %v212 = vld [vmem:[%s205] sm:$0xff]
        %v213 = vld [vmem:[%s205 + $0x8] sm:$0xff]
        %v214 = vld [vmem:[%s205 + $0x10] sm:$0xff]
        %v215 = vld [vmem:[%s205 + $0x18] sm:$0xff]
        %v216 = vld [vmem:[%s205 + $0x20] sm:$0xff]
        %v217 = vld [vmem:[%s205 + $0x28] sm:$0xff]
        %v218 = vld [vmem:[%s205 + $0x30] sm:$0xff]
        %v219 = vld [vmem:[%s205 + $0x38] sm:$0xff]
        %v220 = vld [vmem:[%s205 + $0x40] sm:$0xff]
        %v221 = vld [vmem:[%s205 + $0x48] sm:$0xff]
        %v222 = vld [vmem:[%s205 + $0x50] sm:$0xff]
        %v223 = vld [vmem:[%s205 + $0x58] sm:$0xff]
        %v224 = vld [vmem:[%s205 + $0x60] sm:$0xff]
        %v225 = vld [vmem:[%s205 + $0x68] sm:$0xff]
        %v226 = vld [vmem:[%s205 + $0x70] sm:$0xff]
        %v227 = vld [vmem:[%s205 + $0x78] sm:$0xff]
        %v228 = vld [vmem:[#allocation2] sm:$0xff]
        %vm229 = vcmask 261120
        %v231 = vsel %vm229, %v211, 0
        %v234 = vsel %vm229, %v212, 0
        %v237 = vsel %vm229, %v213, 0
        %v240 = vsel %vm229, %v214, 0
        %v243 = vsel %vm229, %v215, 0
        %v246 = vsel %vm229, %v216, 0
        %v249 = vsel %vm229, %v217, 0
        %v252 = vsel %vm229, %v218, 0
        %v255 = vsel %vm229, %v219, 0
        %v258 = vsel %vm229, %v220, 0
        %v261 = vsel %vm229, %v221, 0
        %v264 = vsel %vm229, %v222, 0
        %v267 = vsel %vm229, %v223, 0
        %v270 = vsel %vm229, %v224, 0
        %v273 = vsel %vm229, %v225, 0
        %v276 = vsel %vm229, %v226, 0
        %v279 = vsel %vm229, %v227, 0
        %281 = vmatpush.xpose.msra.mxu0 %v279
        %282 = vmatpush.xpose.msra.mxu0 %v276
        %283 = vmatpush.xpose.msra.mxu0 %v273
        %284 = vmatpush.xpose.msra.mxu0 %v270
        %285 = vmatpush.xpose.msra.mxu0 %v267
        %286 = vmatpush.xpose.msra.mxu0 %v264
        %287 = vmatpush.xpose.msra.mxu0 %v261
        %288 = vmatpush.xpose.msra.mxu0 %v258
        %289 = vmatpush.xpose.msra.mxu0 %v255
        %290 = vmatpush.xpose.msra.mxu0 %v252
        %291 = vmatpush.xpose.msra.mxu0 %v249
        %292 = vmatpush.xpose.msra.mxu0 %v246
        %293 = vmatpush.xpose.msra.mxu0 %v243
        %294 = vmatpush.xpose.msra.mxu0 %v240
        %295 = vmatpush.xpose.msra.mxu0 %v237
        %296 = vmatpush.xpose.msra.mxu0 %v234
        %297 = vmatmul.f32.gmra.mxu0 %v231
        %v298 = vpop.f32.mrf.mxu0
        %v299 = vadd.f32 0.0, %v298
        %300 = vdwg.mxu0
        %v301 = vadd.f32 %v228, %v299
        %302 = vst [vmem:[#allocation2] sm:$0xff] %v301
        // Predicated region
        $region37: #{tpu_custom_call.1} parent=31 // pred_check
          %p303 = pneg %p206
        $region38: #{tpu_custom_call.1} parent=31 // pred_check_branch
          %305 = sbr.rel (%p303) target = $region40
        $region39: #{tpu_custom_call.1} parent=31 // pred_region
          %v306 = vld [vmem:[#allocation2] sm:$0xff]
          %v307 = vld [vmem:[%s2] sm:$0x1]
          %v309 = vperm.slane %v307, 0
          %v311 = vadd.f32 %v306, %v309
          %v312 = vxor.u32 %v311, 2147483648
          %v313 = vmul.f32 %v312, 1.442695
          %v314 = vpow.pop %v313
          %v315 = vadd.f32 %v314, 1.0
          %v316 = vrcp.pop %v315
          %v317 = vmul.f32 %v315, %v316
          %v318 = vsub.f32 1.0, %v317
          %v319 = vmul.f32 %v316, %v318
          %v320 = vadd.f32 %v316, %v319
          %vm321 = vweird.f32 %v315
          %vm322 = vweird.f32 %v316
          %vm323 = vmor %vm321, %vm322
          %v324 = vsel %vm323, %v316, %v320
          %v325 = vand.u32 2147483647, %v315
          %vm326 = vcmp.eq.f32.partialorder %v325, 8.507059e+37
          %v327 = vand.u32 %v315, 2147483648
          %v328 = vor.u32 1.1754944e-38, %v327
          %v329 = vsel %vm326, %v328, %v324
          %v330 = vmul.f32 1.0, %v329
          %331 = vst [vmem:[%s194] sm:$0xff] %v330
        $region40: #{tpu_custom_call.1} parent=31 // pred_fallthru
          _
        %s332 = sand.u32 %s112, 1
        %s333 = scalar_lea.sflag [#allocation4], %s332
        %s334 = sand.u32 %s112, 1
        %s335 = smul.addr %s334, 8
        %s336 = scalar_lea.vmem [#allocation3], %s335
        // Predicated region
        $region41: #{tpu_custom_call.1} parent=31 // pred_check
          %p337 = pneg %p122
        $region42: #{tpu_custom_call.1} parent=31 // pred_check_branch
          %339 = sbr.rel (%p337) target = $region44
        $region43: #{tpu_custom_call.1} parent=31 // pred_region
          %341 = vsyncadd %s333, 0
          %s342 = smul.addr %s21, 8
          %s343 = scalar_lea.hbm %s3, %s342
          %s345 = sshll.u32 %s336, 4
          %s346 = int_to_ptr.vmem [resolvable:$true] %s345
          %s347 = sshll.u32 %s343, 4
          %s348 = int_to_ptr.hbm [resolvable:$true] %s347
          %350 = dma.vmem_to_hbm [thread:$0]  %s346, 128, %s348, %s333
        $region44: #{tpu_custom_call.1} parent=31 // pred_fallthru
          _
      $region32: #{tpu_custom_call.1} parent=5 // pred_fallthru
        _
      %p351 = scmp.le.s32.totalorder 2, %s12
      // Predicated region
      $region45: #{tpu_custom_call.1} parent=5 // pred_check
        %p352 = pneg %p351
      $region46: #{tpu_custom_call.1} parent=5 // pred_check_branch
        %354 = sbr.rel (%p352) target = $region48
      $region47: #{tpu_custom_call.1} parent=5 // pred_region
        %s355 = ssub.s32 %s12, 2
        // Predicated region
        $region49: #{tpu_custom_call.1} parent=47 // pred_check
          %p356 = pneg %p128
        $region50: #{tpu_custom_call.1} parent=47 // pred_check_branch
          %358 = sbr.rel (%p356) target = $region52
        $region51: #{tpu_custom_call.1} parent=47 // pred_region
          %s359 = sand.u32 %s113, 1
          %s360 = scalar_lea.sflag [#allocation4], %s359
          %s361 = sand.u32 %s113, 1
          %s362 = smul.addr %s361, 8
          %s363 = scalar_lea.vmem [#allocation3], %s362
          %365 = dma.done %s360, 128
        $region52: #{tpu_custom_call.1} parent=47 // pred_fallthru
          _
      $region48: #{tpu_custom_call.1} parent=5 // pred_fallthru
        _
    $region6: #{tpu_custom_call.1} parent=1 // loop_footer
      %s16 = sadd.s32 1, %s12
    $region7: #{tpu_custom_call.1} parent=1 // loop_footer_branch
      %11 = sbr.rel target = $region3
    $region8: #{tpu_custom_call.1} parent=1 // loop_exit
      _
    %366 = vsyncpa [#allocation4], 1
    %s367 = scalar_lea.sflag [#allocation4], 1
    %368 = vsyncpa %s367, 1

// kernel: tpu_custom_call.1
$region0: #{tpu_custom_call.1}
  #allocation0 [shape = 'u32[]', space=smem, size = 0x4, offset = 0x4, fixed_abs, tag = 'smem constant byte address 0x4 - core index']
  #allocation1 [shape = 'u32[72,128]{1,0:T(1,128)}', space=vmem, size = 0x9000, scoped, tag = 'internal scratch']
  #allocation2 [shape = 'f32[8,128]{1,0:T(8,128)}', space=vmem, size = 0x1000, scoped, tag = 'scratch operand']
  %s0 = inlined_call_operand.vmem [shape: f32[12,32], index: 0, kind: input, shape index: {}]
  %s1 = inlined_call_operand.vmem [shape: f32[128,32], index: 1, kind: input, shape index: {}]
  %s2 = inlined_call_operand.vmem [shape: f32[1,128], index: 2, kind: input, shape index: {}]
  %s3 = inlined_call_operand.hbm [shape: f32[12,128], index: 3, kind: output, shape index: {}]
  %s4 = sld [smem:[#allocation0]]
  $region53: #{tpu_custom_call.1} parent=0
    _
  %s6 = ssub.s32 1, %s4
  %s7 = scalar_select 0, %s6, %s4
  $region1: #{tpu_custom_call.1} parent=0
    #allocation3 [shape = 'u8[8192]{0}', space=vmem, size = 0x2000, scoped, tag = 'output window, operand 0']
    #allocation4 [shape = 's32[2]{0}', space=sflag, size = 0x8, scoped, tag = 'scoped memory for tpu_custom_call.1']
    %8 = vsyncpa [#allocation4], 0
    %s9 = scalar_lea.sflag [#allocation4], 1
    %10 = vsyncpa %s9, 0
    loop: start=0, step=1, limit=4
    $region2: #{tpu_custom_call.1} parent=1 // loop_pre_header
      _
    $region3: #{tpu_custom_call.1} parent=1 // loop_header
      %s12 = sphi 0, %s16
      %p13 = scmp.ge.s32.totalorder %s12, 4
      %s19 = sphi 0, %s31
      %s20 = sphi 0, %s27
      %s21 = sphi 0, %s19
      %s22 = sphi 0, %s20
      %s23 = sphi 0, %s21
      %s24 = sphi 0, %s22
      %s36 = sphi 0, %s38
      %s39 = sphi 0, %s36
      %s40 = sphi 0, %s39
      %s56 = sphi 0, %s40
      %s62 = sphi 0, %s64
      %s65 = sphi 0, %s62
      %s66 = sphi 0, %s65
      %s82 = sphi 0, %s66
      %s86 = sphi 0, %s86
      %s88 = sphi 0, %s86
      %s89 = sphi 0, %s88
      %s103 = sphi 0, %s89
      %s109 = sphi 0, %s111
      %s112 = sphi 0, %s109
      %s113 = sphi 0, %s112
      %s129 = sphi 0, %s113
    $region4: #{tpu_custom_call.1} parent=1 // loop_header_branch
      %15 = sbr.rel (%p13) target = $region8
    $region5: #{tpu_custom_call.1} parent=1 // loop_body
      %s17 = ssub.s32 %s12, 1
      %s18 = ssub.s32 %s12, 2
      %s25 = sadd.s32 1, %s20
      %p26 = scmp.ge.s32.totalorder %s25, 1
      %s27 = scalar_select %p26, 0, %s25
      %s28 = sadd.s32 1, %s19
      %s29 = scalar_select %p26, %s28, %s19
      %p30 = scmp.ge.s32.totalorder %s29, 2
      %s31 = scalar_select %p30, 0, %s29
      %s32 = ssub.s32 %s19, %s31
      %s33 = ssub.s32 %s20, %s27
      %s34 = sor.u32 %s32, %s33
      %p35 = scmp.eq.s32.totalorder %s34, 0
      %s37 = sadd.s32 %s36, 1
      %s38 = scalar_select %p35, %s36, %s37
      %p41 = pneg %p35
      %p42 = scmp.eq.s32.totalorder %s12, 1
      %p43 = por %p41, %p42
      %p44 = scmp.ne.s32.totalorder %s36, %s39
      %p45 = scmp.eq.s32.totalorder %s12, 0
      %p46 = por %p44, %p45
      %p47 = scmp.ne.s32.totalorder %s36, %s39
      %p48 = scmp.eq.s32.totalorder %s17, 1
      %p49 = por %p47, %p48
      %p50 = scmp.ne.s32.totalorder %s39, %s40
      %p51 = scmp.eq.s32.totalorder %s17, 0
      %p52 = por %p50, %p51
      %p53 = scmp.ne.s32.totalorder %s39, %s40
      %p54 = scmp.eq.s32.totalorder %s18, 1
      %p55 = por %p53, %p54
      %p57 = scmp.ne.s32.totalorder %s40, %s56
      %p58 = scmp.eq.s32.totalorder %s18, 0
      %p59 = por %p57, %p58
      %s60 = ssub.s32 %s20, %s27
      %p61 = scmp.eq.s32.totalorder %s60, 0
      %s63 = sadd.s32 %s62, 1
      %s64 = scalar_select %p61, %s62, %s63
      %p67 = pneg %p61
      %p68 = scmp.eq.s32.totalorder %s12, 1
      %p69 = por %p67, %p68
      %p70 = scmp.ne.s32.totalorder %s62, %s65
      %p71 = scmp.eq.s32.totalorder %s12, 0
      %p72 = por %p70, %p71
      %p73 = scmp.ne.s32.totalorder %s62, %s65
      %p74 = scmp.eq.s32.totalorder %s17, 1
      %p75 = por %p73, %p74
      %p76 = scmp.ne.s32.totalorder %s65, %s66
      %p77 = scmp.eq.s32.totalorder %s17, 0
      %p78 = por %p76, %p77
      %p79 = scmp.ne.s32.totalorder %s65, %s66
      %p80 = scmp.eq.s32.totalorder %s18, 1
      %p81 = por %p79, %p80
      %p83 = scmp.ne.s32.totalorder %s66, %s82
      %p84 = scmp.eq.s32.totalorder %s18, 0
      %p85 = por %p83, %p84
      %s87 = sadd.s32 %s86, 1
      %p90 = scmp.eq.s32.totalorder %s12, 1
      %p91 = scmp.ne.s32.totalorder %s86, %s88
      %p92 = scmp.eq.s32.totalorder %s12, 0
      %p93 = por %p91, %p92
      %p94 = scmp.ne.s32.totalorder %s86, %s88
      %p95 = scmp.eq.s32.totalorder %s17, 1
      %p96 = por %p94, %p95
      %p97 = scmp.ne.s32.totalorder %s88, %s89
      %p98 = scmp.eq.s32.totalorder %s17, 0
      %p99 = por %p97, %p98
      %p100 = scmp.ne.s32.totalorder %s88, %s89
      %p101 = scmp.eq.s32.totalorder %s18, 1
      %p102 = por %p100, %p101
      %p104 = scmp.ne.s32.totalorder %s89, %s103
      %p105 = scmp.eq.s32.totalorder %s18, 0
      %p106 = por %p104, %p105
      %s107 = ssub.s32 %s19, %s31
      %p108 = scmp.eq.s32.totalorder %s107, 0
      %s110 = sadd.s32 %s109, 1
      %s111 = scalar_select %p108, %s109, %s110
      %p114 = pneg %p108
      %p115 = scmp.eq.s32.totalorder %s12, 1
      %p116 = por %p114, %p115
      %p117 = scmp.ne.s32.totalorder %s109, %s112
      %p118 = scmp.eq.s32.totalorder %s12, 0
      %p119 = por %p117, %p118
      %p120 = scmp.ne.s32.totalorder %s109, %s112
      %p121 = scmp.eq.s32.totalorder %s17, 1
      %p122 = por %p120, %p121
      %p123 = scmp.ne.s32.totalorder %s112, %s113
      %p124 = scmp.eq.s32.totalorder %s17, 0
      %p125 = por %p123, %p124
      %p126 = scmp.ne.s32.totalorder %s112, %s113
      %p127 = scmp.eq.s32.totalorder %s18, 1
      %p128 = por %p126, %p127
      %p130 = scmp.ne.s32.totalorder %s113, %s129
      %p131 = scmp.eq.s32.totalorder %s18, 0
      %p132 = por %p130, %p131
      %p133 = scmp.le.s32.totalorder 1, %s12
      %p134 = scmp.lt.s32.totalorder %s12, 3
      %p135 = pnand %p133, %p134
      %p136 = pneg %p135
      // Predicated region
      $region9: #{tpu_custom_call.1} parent=5 // pred_check
        _
      $region10: #{tpu_custom_call.1} parent=5 // pred_check_branch
        %138 = sbr.rel (%p135) target = $region12
      $region11: #{tpu_custom_call.1} parent=5 // pred_region
        %s139 = ssub.s32 %s12, 1
        // Predicated region
        $region13: #{tpu_custom_call.1} parent=11 // pred_check
          %p140 = pneg %p78
        $region14: #{tpu_custom_call.1} parent=11 // pred_check_branch
          %142 = sbr.rel (%p140) target = $region16
        $region15: #{tpu_custom_call.1} parent=11 // pred_region
          %p143 = scmp.lt.s32.totalorder %s22, 0
          %s144 = scalar_select %p143, %s22, 0
          %s145 = smul.addr %s144, 8
          %s146 = scalar_lea.vmem %s1, %s145
        $region16: #{tpu_custom_call.1} parent=11 // pred_fallthru
          _
        // Predicated region
        $region17: #{tpu_custom_call.1} parent=11 // pred_check
          %p147 = pneg %p99
        $region18: #{tpu_custom_call.1} parent=11 // pred_check_branch
          %149 = sbr.rel (%p147) target = $region20
        $region19: #{tpu_custom_call.1} parent=11 // pred_region
          _
        $region20: #{tpu_custom_call.1} parent=11 // pred_fallthru
          _
      $region12: #{tpu_custom_call.1} parent=5 // pred_fallthru
        _
      %p150 = scmp.lt.s32.totalorder %s12, 2
      // Predicated region
      $region21: #{tpu_custom_call.1} parent=5 // pred_check
        %p151 = pneg %p150
      $region22: #{tpu_custom_call.1} parent=5 // pred_check_branch
        %153 = sbr.rel (%p151) target = $region24
      $region23: #{tpu_custom_call.1} parent=5 // pred_region
        // Predicated region
        $region25: #{tpu_custom_call.1} parent=23 // pred_check
          %p154 = pneg %p46
        $region26: #{tpu_custom_call.1} parent=23 // pred_check_branch
          %156 = sbr.rel (%p154) target = $region28
        $region27: #{tpu_custom_call.1} parent=23 // pred_region
          %p157 = scmp.lt.s32.totalorder %s19, 1
          %s158 = scalar_select %p157, %s19, 1
          %p159 = scmp.lt.s32.totalorder %s20, 0
          %s160 = scalar_select %p159, %s20, 0
          %s161 = sadd.s32 %s160, %s158
          %s162 = smul.addr %s161, 8
          %s163 = scalar_lea.vmem %s0, %s162
        $region28: #{tpu_custom_call.1} parent=23 // pred_fallthru
          _
      $region24: #{tpu_custom_call.1} parent=5 // pred_fallthru
        _
      %p164 = scmp.le.s32.totalorder 1, %s12
      %p165 = scmp.lt.s32.totalorder %s12, 3
      %p166 = pnand %p164, %p165
      %p167 = pneg %p166
      // Predicated region
      $region29: #{tpu_custom_call.1} parent=5 // pred_check
        _
      $region30: #{tpu_custom_call.1} parent=5 // pred_check_branch
        %169 = sbr.rel (%p166) target = $region32
      $region31: #{tpu_custom_call.1} parent=5 // pred_region
        %s170 = ssub.s32 %s12, 1
        %p171 = scmp.lt.s32.totalorder %s21, 1
        %s172 = scalar_select %p171, %s21, 1
        %p173 = scmp.lt.s32.totalorder %s22, 0
        %s174 = scalar_select %p173, %s22, 0
        %s175 = sadd.s32 %s174, %s172
        %s176 = smul.addr %s175, 8
        %s177 = scalar_lea.vmem %s0, %s176
        %p178 = pneg %p52
        %p179 = pneg %p49
        %p180 = scmp.lt.s32.totalorder %s22, 0
        %s181 = scalar_select %p180, %s22, 0
        %s182 = smul.addr %s181, 8
        %s183 = scalar_lea.vmem %s1, %s182
        %p184 = pneg %p78
        %p185 = pneg %p75
        %p186 = pneg %p99
        %p187 = pneg %p96
        %p188 = pneg %p125
        %p189 = pneg %p122
        %s190 = sand.u32 %s112, 1
        %s191 = scalar_lea.sflag [#allocation4], %s190
        %s192 = sand.u32 %s112, 1
        %s193 = smul.addr %s192, 8
        %s194 = scalar_lea.vmem [#allocation3], %s193
        %p195 = scmp.lt.s32.totalorder %s21, 1
        %s196 = scalar_select %p195, %s21, 1
        %p197 = scmp.lt.s32.totalorder %s22, 0
        %s198 = scalar_select %p197, %s22, 0
        %s199 = sadd.s32 %s198, %s196
        %s200 = smul.addr %s199, 8
        %s201 = scalar_lea.vmem %s0, %s200
        %p202 = scmp.lt.s32.totalorder %s22, 0
        %s203 = scalar_select %p202, %s22, 0
        %s204 = smul.addr %s203, 8
        %s205 = scalar_lea.vmem %s1, %s204
        %p206 = scmp.eq.s32.totalorder %s22, 0
        // Predicated region
        $region33: #{tpu_custom_call.1} parent=31 // pred_check
          %p207 = pneg %p206
        $region34: #{tpu_custom_call.1} parent=31 // pred_check_branch
          %209 = sbr.rel (%p207) target = $region36
        $region35: #{tpu_custom_call.1} parent=31 // pred_region
          %210 = vst [vmem:[#allocation2] sm:$0xff] 0.0
        $region36: #{tpu_custom_call.1} parent=31 // pred_fallthru
          _
        %v211 = vld [vmem:[%s201] sm:$0xff]
        %v212 = vld [vmem:[%s205] sm:$0xff]
        %v213 = vld [vmem:[%s205 + $0x8] sm:$0xff]
        %v214 = vld [vmem:[%s205 + $0x10] sm:$0xff]
        %v215 = vld [vmem:[%s205 + $0x18] sm:$0xff]
        %v216 = vld [vmem:[%s205 + $0x20] sm:$0xff]
        %v217 = vld [vmem:[%s205 + $0x28] sm:$0xff]
        %v218 = vld [vmem:[%s205 + $0x30] sm:$0xff]
        %v219 = vld [vmem:[%s205 + $0x38] sm:$0xff]
        %v220 = vld [vmem:[%s205 + $0x40] sm:$0xff]
        %v221 = vld [vmem:[%s205 + $0x48] sm:$0xff]
        %v222 = vld [vmem:[%s205 + $0x50] sm:$0xff]
        %v223 = vld [vmem:[%s205 + $0x58] sm:$0xff]
        %v224 = vld [vmem:[%s205 + $0x60] sm:$0xff]
        %v225 = vld [vmem:[%s205 + $0x68] sm:$0xff]
        %v226 = vld [vmem:[%s205 + $0x70] sm:$0xff]
        %v227 = vld [vmem:[%s205 + $0x78] sm:$0xff]
        %v228 = vld [vmem:[#allocation2] sm:$0xff]
        %vm229 = vcmask 261120
        %v231 = vsel %vm229, %v211, 0
        %v234 = vsel %vm229, %v212, 0
        %v237 = vsel %vm229, %v213, 0
        %v240 = vsel %vm229, %v214, 0
        %v243 = vsel %vm229, %v215, 0
        %v246 = vsel %vm229, %v216, 0
        %v249 = vsel %vm229, %v217, 0
        %v252 = vsel %vm229, %v218, 0
        %v255 = vsel %vm229, %v219, 0
        %v258 = vsel %vm229, %v220, 0
        %v261 = vsel %vm229, %v221, 0
        %v264 = vsel %vm229, %v222, 0
        %v267 = vsel %vm229, %v223, 0
        %v270 = vsel %vm229, %v224, 0
        %v273 = vsel %vm229, %v225, 0
        %v276 = vsel %vm229, %v226, 0
        %v279 = vsel %vm229, %v227, 0
        %281 = vmatpush.xpose.msra.mxu0 %v279
        %282 = vmatpush.xpose.msra.mxu0 %v276
        %283 = vmatpush.xpose.msra.mxu0 %v273
        %284 = vmatpush.xpose.msra.mxu0 %v270
        %285 = vmatpush.xpose.msra.mxu0 %v267
        %286 = vmatpush.xpose.msra.mxu0 %v264
        %287 = vmatpush.xpose.msra.mxu0 %v261
        %288 = vmatpush.xpose.msra.mxu0 %v258
        %289 = vmatpush.xpose.msra.mxu0 %v255
        %290 = vmatpush.xpose.msra.mxu0 %v252
        %291 = vmatpush.xpose.msra.mxu0 %v249
        %292 = vmatpush.xpose.msra.mxu0 %v246
        %293 = vmatpush.xpose.msra.mxu0 %v243
        %294 = vmatpush.xpose.msra.mxu0 %v240
        %295 = vmatpush.xpose.msra.mxu0 %v237
        %296 = vmatpush.xpose.msra.mxu0 %v234
        %297 = vmatmul.f32.gmra.mxu0 %v231
        %v298 = vpop.f32.mrf.mxu0
        %v299 = vadd.f32 0.0, %v298
        %300 = vdwg.mxu0
        %v301 = vadd.f32 %v228, %v299
        %302 = vst [vmem:[#allocation2] sm:$0xff] %v301
        // Predicated region
        $region37: #{tpu_custom_call.1} parent=31 // pred_check
          %p303 = pneg %p206
        $region38: #{tpu_custom_call.1} parent=31 // pred_check_branch
          %305 = sbr.rel (%p303) target = $region40
        $region39: #{tpu_custom_call.1} parent=31 // pred_region
          %v306 = vld [vmem:[#allocation2] sm:$0xff]
          %v307 = vld [vmem:[%s2] sm:$0x1]
          %v309 = vperm.slane %v307, 0
          %v311 = vadd.f32 %v306, %v309
          %v312 = vxor.u32 %v311, 2147483648
          %v313 = vmul.f32 %v312, 1.442695
          %v314 = vpow.pop %v313
          %v315 = vadd.f32 %v314, 1.0
          %v316 = vrcp.pop %v315
          %v317 = vmul.f32 %v315, %v316
          %v318 = vsub.f32 1.0, %v317
          %v319 = vmul.f32 %v316, %v318
          %v320 = vadd.f32 %v316, %v319
          %vm321 = vweird.f32 %v315
          %vm322 = vweird.f32 %v316
          %vm323 = vmor %vm321, %vm322
          %v324 = vsel %vm323, %v316, %v320
          %v325 = vand.u32 2147483647, %v315
          %vm326 = vcmp.eq.f32.partialorder %v325, 8.507059e+37
          %v327 = vand.u32 %v315, 2147483648
          %v328 = vor.u32 1.1754944e-38, %v327
          %v329 = vsel %vm326, %v328, %v324
          %v330 = vmul.f32 1.0, %v329
          %331 = vst [vmem:[%s194] sm:$0xff] %v330
        $region40: #{tpu_custom_call.1} parent=31 // pred_fallthru
          _
        %s332 = sand.u32 %s112, 1
        %s333 = scalar_lea.sflag [#allocation4], %s332
        %s334 = sand.u32 %s112, 1
        %s335 = smul.addr %s334, 8
        %s336 = scalar_lea.vmem [#allocation3], %s335
        // Predicated region
        $region41: #{tpu_custom_call.1} parent=31 // pred_check
          %p337 = pneg %p122
        $region42: #{tpu_custom_call.1} parent=31 // pred_check_branch
          %339 = sbr.rel (%p337) target = $region44
        $region43: #{tpu_custom_call.1} parent=31 // pred_region
          %341 = vsyncadd %s333, 0
          %s342 = smul.addr %s21, 8
          %s343 = scalar_lea.hbm %s3, %s342
          %s345 = sshll.u32 %s336, 4
          %s346 = int_to_ptr.vmem [resolvable:$true] %s345
          %s347 = sshll.u32 %s343, 4
          %s348 = int_to_ptr.hbm [resolvable:$true] %s347
          %350 = dma.vmem_to_hbm [thread:$0]  %s346, 128, %s348, %s333
        $region44: #{tpu_custom_call.1} parent=31 // pred_fallthru
          _
      $region32: #{tpu_custom_call.1} parent=5 // pred_fallthru
        _
      %p351 = scmp.le.s32.totalorder 2, %s12
      // Predicated region
      $region45: #{tpu_custom_call.1} parent=5 // pred_check
        %p352 = pneg %p351
      $region46: #{tpu_custom_call.1} parent=5 // pred_check_branch
        %354 = sbr.rel (%p352) target = $region48
      $region47: #{tpu_custom_call.1} parent=5 // pred_region
        %s355 = ssub.s32 %s12, 2
        // Predicated region
        $region49: #{tpu_custom_call.1} parent=47 // pred_check
          %p356 = pneg %p128
        $region50: #{tpu_custom_call.1} parent=47 // pred_check_branch
          %358 = sbr.rel (%p356) target = $region52
        $region51: #{tpu_custom_call.1} parent=47 // pred_region
          %s359 = sand.u32 %s113, 1
          %s360 = scalar_lea.sflag [#allocation4], %s359
          %s361 = sand.u32 %s113, 1
          %s362 = smul.addr %s361, 8
          %s363 = scalar_lea.vmem [#allocation3], %s362
          %365 = dma.done %s360, 128
        $region52: #{tpu_custom_call.1} parent=47 // pred_fallthru
          _
      $region48: #{tpu_custom_call.1} parent=5 // pred_fallthru
        _
    $region6: #{tpu_custom_call.1} parent=1 // loop_footer
      %s16 = sadd.s32 1, %s12
    $region7: #{tpu_custom_call.1} parent=1 // loop_footer_branch
      %11 = sbr.rel target = $region3
    $region8: #{tpu_custom_call.1} parent=1 // loop_exit
      _
    %366 = vsyncpa [#allocation4], 1
    %s367 = scalar_lea.sflag [#allocation4], 1
    %368 = vsyncpa %s367, 1

</llo_original>
